<compile_context>
chip_gen: v7x
topology: tpu7x:2x2x1
jax: 0.10.0
libtpu: 0.0.40
codegen_flags: <defaults>
</compile_context>

<pallas_src>
import functools

import jax
import jax.numpy as jnp
from jax.experimental import pallas as pl
from jax.experimental.pallas import tpu as pltpu

N_INPUT = 3    # args.is2d is False -> 3
N_OUTPUT = 2

_LANE = 128     # vreg lane width
_SUBLANE = 8    # vreg sublane depth (f32)


def _round_up(v, m):
    return (v + m - 1) // m * m


def _linear_kernel(x_ref, w_ref, b_ref, o_ref):
    # x_ref: (K, SB, 128)  VMEM input feature planes (batch on sublane/lane)
    # w_ref: (K, N)        SMEM weight (already transposed)
    # b_ref: (N,)          SMEM bias
    # o_ref: (N, SB, 128)  VMEM output planes
    K = x_ref.shape[0]
    N = o_ref.shape[0]
    # Load each input plane exactly once; they're reused for every output n.
    planes = [x_ref[k] for k in range(K)]            # (SB, 128) each
    for n in range(N):
        # Full-slab scalar-broadcast FMAs on the VPU; scalars come from SMEM.
        acc = planes[0] * w_ref[0, n] + b_ref[n]
        for k in range(1, K):
            acc = acc + planes[k] * w_ref[k, n]
        o_ref[n] = acc                                # one unmasked lane-dense store


@functools.partial(jax.jit, static_argnames=("block_b",))
def perceptron_forward(x, weight_t, bias, *, block_b=64 * 1024):
    """x: (B, n_input) f32; weight_t: (n_input, n_output) f32 (pre-transposed);
    bias: (n_output,) f32.  Returns (B, n_output) f32.

    block_b: target batch elements per grid step (rounded to 8*128-aligned
    slabs).  Default keeps per-step VMEM ~2.6 MiB double-buffered, safe on
    v5e/v6e/v7x; larger B yields >=2 grid steps so v7x uses both TCs.
    """
    B, K = x.shape
    N = weight_t.shape[1]

    # Total sublane-rows of 128 batch elements each.
    R = _round_up(B, _LANE) // _LANE
    # Rows per grid step: full extent when tiny, else an 8-multiple slab.
    max_rows = max(_SUBLANE, (block_b // _LANE) // _SUBLANE * _SUBLANE)
    if R <= _SUBLANE:
        SB = R                                  # block dim == full dim
    else:
        SB = min(max_rows, _round_up(R, _SUBLANE))
    Rp = _round_up(R, SB)
    Bp = Rp * _LANE

    # Layout plumbing: put batch on the lane/sublane axes.  Transpose and pad
    # are fused into a single scatter-write (no separate full pad pass);
    # padding is bounded by < one slab.
    x_planes = (jnp.zeros((K, Bp), x.dtype).at[:, :B].set(x.T)
                .reshape(K, Rp, _LANE))

    out = pl.pallas_call(
        _linear_kernel,
        out_shape=jax.ShapeDtypeStruct((N, Rp, _LANE), x.dtype),
        grid_spec=pltpu.PrefetchScalarGridSpec(
            num_scalar_prefetch=0,
            grid=(Rp // SB,),
            in_specs=[
                pl.BlockSpec((K, SB, _LANE), lambda i: (0, i, 0)),
                pl.BlockSpec(memory_space=pltpu.MemorySpace.SMEM),  # weight_t
                pl.BlockSpec(memory_space=pltpu.MemorySpace.SMEM),  # bias
            ],
            out_specs=pl.BlockSpec((N, SB, _LANE), lambda i: (0, i, 0)),
        ),
        compiler_params=pltpu.CompilerParams(
            dimension_semantics=("parallel",)),
    )(x_planes, weight_t, bias)

    # Undo the layout plumbing: (N, Bp) -> (B, N).  Padded tail rows (zeros ->
    # bias-only values) are sliced off here.
    return out.reshape(N, Bp)[:, :B].T


if __name__ == "__main__":
    key = jax.random.PRNGKey(0)
    kx, kw, kb = jax.random.split(key, 3)

    B = 8  # small batch of 3-D points
    x = jax.random.normal(kx, (B, N_INPUT), dtype=jnp.float32)

    # Deterministic init mimicking nn.Linear: U(-1/sqrt(in), 1/sqrt(in))
    bound = 1.0 / (N_INPUT ** 0.5)
    weight = jax.random.uniform(kw, (N_OUTPUT, N_INPUT), jnp.float32,
                                minval=-bound, maxval=bound)
    bias = jax.random.uniform(kb, (N_OUTPUT,), jnp.float32,
                              minval=-bound, maxval=bound)

    # Hoisted once at init (static across forward calls).
    weight_t = jnp.asarray(weight.T)   # (n_input, n_output)

    out = jax.block_until_ready(perceptron_forward(x, weight_t, bias))
    ref = x @ weight.T + bias
    assert out.shape == (B, N_OUTPUT)
    assert jnp.allclose(out, ref, atol=1e-5, rtol=1e-5)

    # Ragged batch (B % 128 != 0), still a single-step grid.
    B2 = 300
    x2 = jax.random.normal(jax.random.PRNGKey(1), (B2, N_INPUT), jnp.float32)
    out2 = jax.block_until_ready(perceptron_forward(x2, weight_t, bias))
    ref2 = x2 @ weight.T + bias
    assert out2.shape == (B2, N_OUTPUT)
    assert jnp.allclose(out2, ref2, atol=1e-5, rtol=1e-5)

    # Multi-step pipelined grid path (8-row slabs, 2 grid steps).
    B3 = 2000
    x3 = jax.random.normal(jax.random.PRNGKey(2), (B3, N_INPUT), jnp.float32)
    out3 = jax.block_until_ready(
        perceptron_forward(x3, weight_t, bias, block_b=1024))
    ref3 = x3 @ weight.T + bias
    assert out3.shape == (B3, N_OUTPUT)
    assert jnp.allclose(out3, ref3, atol=1e-5, rtol=1e-5)

    print("KERNEL_OK")
</pallas_src>

<mosaic_0001>
module attributes {stable_mosaic.version = 11 : i64} {
  func.func @_linear_kernel(%arg0: i32, %arg1: memref<3x1x128xf32, #tpu.memory_space<vmem>>, %arg2: memref<3x2xf32, #tpu.memory_space<smem>>, %arg3: memref<2xf32, #tpu.memory_space<smem>>, %arg4: memref<2x1x128xf32, #tpu.memory_space<vmem>>) attributes {dimension_semantics = [#tpu.dimension_semantics<parallel>], iteration_bounds = array<i64: 1>, scalar_prefetch = 0 : i64, scratch_operands = 0 : i64, tpu.core_type = #tpu.core_type<tc>, window_params = [{transform_indices = @transform_0, window_bounds = array<i64: 3, 1, 128>}, {transform_indices = @transform_1, window_bounds = array<i64: 3, 2>}, {transform_indices = @transform_2, window_bounds = array<i64: 2>}, {transform_indices = @transform_3, window_bounds = array<i64: 2, 1, 128>}]} {
    %c0 = arith.constant 0 : index
    %c0_0 = arith.constant 0 : index
    %c0_1 = arith.constant 0 : index
    %0 = vector.load %arg1[%c0, %c0_0, %c0_1] : memref<3x1x128xf32, #tpu.memory_space<vmem>>, vector<1x1x128xf32>
    %1 = vector.shape_cast %0 : vector<1x1x128xf32> to vector<1x128xf32>
    %c1 = arith.constant 1 : index
    %c0_2 = arith.constant 0 : index
    %c0_3 = arith.constant 0 : index
    %2 = vector.load %arg1[%c1, %c0_2, %c0_3] : memref<3x1x128xf32, #tpu.memory_space<vmem>>, vector<1x1x128xf32>
    %3 = vector.shape_cast %2 : vector<1x1x128xf32> to vector<1x128xf32>
    %c2 = arith.constant 2 : index
    %c0_4 = arith.constant 0 : index
    %c0_5 = arith.constant 0 : index
    %4 = vector.load %arg1[%c2, %c0_4, %c0_5] : memref<3x1x128xf32, #tpu.memory_space<vmem>>, vector<1x1x128xf32>
    %5 = vector.shape_cast %4 : vector<1x1x128xf32> to vector<1x128xf32>
    %c0_6 = arith.constant 0 : index
    %c0_7 = arith.constant 0 : index
    %6 = memref.load %arg2[%c0_6, %c0_7] : memref<3x2xf32, #tpu.memory_space<smem>>
    %7 = vector.broadcast %6 : f32 to vector<1x128xf32>
    %8 = arith.mulf %1, %7 : vector<1x128xf32>
    %c0_8 = arith.constant 0 : index
    %9 = memref.load %arg3[%c0_8] : memref<2xf32, #tpu.memory_space<smem>>
    %10 = vector.broadcast %9 : f32 to vector<1x128xf32>
    %11 = arith.addf %8, %10 : vector<1x128xf32>
    %c1_9 = arith.constant 1 : index
    %c0_10 = arith.constant 0 : index
    %12 = memref.load %arg2[%c1_9, %c0_10] : memref<3x2xf32, #tpu.memory_space<smem>>
    %13 = vector.broadcast %12 : f32 to vector<1x128xf32>
    %14 = arith.mulf %3, %13 : vector<1x128xf32>
    %15 = arith.addf %11, %14 : vector<1x128xf32>
    %c2_11 = arith.constant 2 : index
    %c0_12 = arith.constant 0 : index
    %16 = memref.load %arg2[%c2_11, %c0_12] : memref<3x2xf32, #tpu.memory_space<smem>>
    %17 = vector.broadcast %16 : f32 to vector<1x128xf32>
    %18 = arith.mulf %5, %17 : vector<1x128xf32>
    %19 = arith.addf %15, %18 : vector<1x128xf32>
    %c0_13 = arith.constant 0 : index
    %c0_14 = arith.constant 0 : index
    %c0_15 = arith.constant 0 : index
    %20 = vector.load %arg4[%c0_13, %c0_14, %c0_15] : memref<2x1x128xf32, #tpu.memory_space<vmem>>, vector<1x1x128xf32>
    %21 = vector.shape_cast %20 : vector<1x1x128xf32> to vector<1x128xf32>
    %22 = vector.shape_cast %19 : vector<1x128xf32> to vector<1x1x128xf32>
    tpu.vector_store %arg4[%c0_13, %c0_14, %c0_15], %22 {strides = array<i32>} : memref<2x1x128xf32, #tpu.memory_space<vmem>>, vector<1x1x128xf32>,
    %c0_16 = arith.constant 0 : index
    %c1_17 = arith.constant 1 : index
    %23 = memref.load %arg2[%c0_16, %c1_17] : memref<3x2xf32, #tpu.memory_space<smem>>
    %24 = vector.broadcast %23 : f32 to vector<1x128xf32>
    %25 = arith.mulf %1, %24 : vector<1x128xf32>
    %c1_18 = arith.constant 1 : index
    %26 = memref.load %arg3[%c1_18] : memref<2xf32, #tpu.memory_space<smem>>
    %27 = vector.broadcast %26 : f32 to vector<1x128xf32>
    %28 = arith.addf %25, %27 : vector<1x128xf32>
    %c1_19 = arith.constant 1 : index
    %c1_20 = arith.constant 1 : index
    %29 = memref.load %arg2[%c1_19, %c1_20] : memref<3x2xf32, #tpu.memory_space<smem>>
    %30 = vector.broadcast %29 : f32 to vector<1x128xf32>
    %31 = arith.mulf %3, %30 : vector<1x128xf32>
    %32 = arith.addf %28, %31 : vector<1x128xf32>
    %c2_21 = arith.constant 2 : index
    %c1_22 = arith.constant 1 : index
    %33 = memref.load %arg2[%c2_21, %c1_22] : memref<3x2xf32, #tpu.memory_space<smem>>
    %34 = vector.broadcast %33 : f32 to vector<1x128xf32>
    %35 = arith.mulf %5, %34 : vector<1x128xf32>
    %36 = arith.addf %32, %35 : vector<1x128xf32>
    %c1_23 = arith.constant 1 : index
    %c0_24 = arith.constant 0 : index
    %c0_25 = arith.constant 0 : index
    %37 = vector.load %arg4[%c1_23, %c0_24, %c0_25] : memref<2x1x128xf32, #tpu.memory_space<vmem>>, vector<1x1x128xf32>
    %38 = vector.shape_cast %37 : vector<1x1x128xf32> to vector<1x128xf32>
    %39 = vector.shape_cast %36 : vector<1x128xf32> to vector<1x1x128xf32>
    tpu.vector_store %arg4[%c1_23, %c0_24, %c0_25], %39 {strides = array<i32>} : memref<2x1x128xf32, #tpu.memory_space<vmem>>, vector<1x1x128xf32>,
    return
  }
  func.func @transform_0(%arg0: i32) -> (i32, i32, i32) {
    %c0_i32 = arith.constant 0 : i32
    %c0_i32_0 = arith.constant 0 : i32
    %c0_i32_1 = arith.constant 0 : i32
    return %c0_i32, %arg0, %c0_i32_0 : i32, i32, i32
  }
  func.func @transform_1(%arg0: i32) -> (i32, i32) {
    %c0_i32 = arith.constant 0 : i32
    %c0_i32_0 = arith.constant 0 : i32
    %c0_i32_1 = arith.constant 0 : i32
    return %c0_i32, %c0_i32_0 : i32, i32
  }
  func.func @transform_2(%arg0: i32) -> i32 {
    %c0_i32 = arith.constant 0 : i32
    %c0_i32_0 = arith.constant 0 : i32
    return %c0_i32 : i32
  }
  func.func @transform_3(%arg0: i32) -> (i32, i32, i32) {
    %c0_i32 = arith.constant 0 : i32
    %c0_i32_0 = arith.constant 0 : i32
    %c0_i32_1 = arith.constant 0 : i32
    return %c0_i32, %arg0, %c0_i32_0 : i32, i32, i32
  }
}

</mosaic_0001>

<llo_original>
// kernel: perceptron_forward.1
$region0: #{perceptron_forward.1}
  #allocation0 [shape = 'u32[]', space=smem, size = 0x4, offset = 0x4, fixed_abs, tag = 'smem constant byte address 0x4 - core index']
  #allocation1 [shape = 'u32[144,128]{1,0:T(1,128)}', space=vmem, size = 0x12000, scoped, tag = 'internal scratch']
  %s0 = inlined_call_operand.vmem [shape: f32[3,1,128], index: 0, kind: input, shape index: {}]
  %s1 = inlined_call_operand.vmem [shape: f32[3,2], index: 1, kind: input, shape index: {}]
  %s2 = inlined_call_operand.vmem [shape: f32[2], index: 2, kind: input, shape index: {}]
  %s3 = inlined_call_operand.vmem [shape: f32[2,1,128], index: 3, kind: output, shape index: {}]
  %s4 = sld [smem:[#allocation0]]
  $region30: #{perceptron_forward.1} parent=0
    _
  %s6 = ssub.s32 1, %s4
  %s7 = scalar_select 0, %s6, %s4
  $region1: #{perceptron_forward.1} parent=0
    #allocation2 [shape = 'u8[2048]{0}', space=smem, size = 0x800, scoped, tag = 'input window, operand 1, single buffered']
    #allocation3 [shape = 's32[1]{0}', space=sflag, size = 0x4, scoped, tag = 'scoped memory for perceptron_forward.1']
    #allocation4 [shape = 'u8[512]{0}', space=smem, size = 0x200, scoped, tag = 'input window, operand 2, single buffered']
    #allocation5 [shape = 's32[1]{0}', space=sflag, size = 0x4, scoped, tag = 'scoped memory for perceptron_forward.1']
    %8 = vsyncpa [#allocation3], 0
    %9 = vsyncpa [#allocation5], 0
    // Predicated region
    $region2: #{perceptron_forward.1} parent=1 // pred_check
      _
    $region3: #{perceptron_forward.1} parent=1 // pred_check_branch
      %11 = sbr.rel (0) target = $region5
    $region4: #{perceptron_forward.1} parent=1 // pred_region
      _
    $region5: #{perceptron_forward.1} parent=1 // pred_fallthru
      _
    // Predicated region
    $region6: #{perceptron_forward.1} parent=1 // pred_check
      _
    $region7: #{perceptron_forward.1} parent=1 // pred_check_branch
      %13 = sbr.rel (0) target = $region9
    $region8: #{perceptron_forward.1} parent=1 // pred_region
      %s15 = ssub.s32 64, 64
      %16 = vsyncadd [#allocation3], %s15
      %s18 = sshll.u32 %s1, 4
      %s19 = int_to_ptr.vmem [resolvable:$true] %s18
      %21 = dma.vmem_to_smem %s19, 64, [#allocation2], [#allocation3]
    $region9: #{perceptron_forward.1} parent=1 // pred_fallthru
      _
    // Predicated region
    $region10: #{perceptron_forward.1} parent=1 // pred_check
      _
    $region11: #{perceptron_forward.1} parent=1 // pred_check_branch
      %23 = sbr.rel (0) target = $region13
    $region12: #{perceptron_forward.1} parent=1 // pred_region
      %s25 = ssub.s32 16, 16
      %26 = vsyncadd [#allocation5], %s25
      %s28 = sshll.u32 %s2, 4
      %s29 = int_to_ptr.vmem [resolvable:$true] %s28
      %31 = dma.vmem_to_smem %s29, 16, [#allocation4], [#allocation5]
    $region13: #{perceptron_forward.1} parent=1 // pred_fallthru
      _
    // Predicated region
    $region14: #{perceptron_forward.1} parent=1 // pred_check
      _
    $region15: #{perceptron_forward.1} parent=1 // pred_check_branch
      %33 = sbr.rel (0) target = $region17
    $region16: #{perceptron_forward.1} parent=1 // pred_region
      %34 = dma.done [#allocation3], 64
    $region17: #{perceptron_forward.1} parent=1 // pred_fallthru
      _
    // Predicated region
    $region18: #{perceptron_forward.1} parent=1 // pred_check
      _
    $region19: #{perceptron_forward.1} parent=1 // pred_check_branch
      %36 = sbr.rel (0) target = $region21
    $region20: #{perceptron_forward.1} parent=1 // pred_region
      %37 = dma.done [#allocation5], 16
    $region21: #{perceptron_forward.1} parent=1 // pred_fallthru
      _
    %38 = sfence
    %v39 = vld [vmem:[%s0] sm:$0x1]
    %s40 = scalar_lea.vmem %s0, 1
    %v41 = vld [vmem:[%s40] sm:$0x1]
    %s42 = scalar_lea.vmem %s0, 2
    %v43 = vld [vmem:[%s42] sm:$0x1]
    %s44 = sld [smem:[#allocation2]]
    %v45 = vstv %s44
    %v46 = vmul.f32 %v39, %v45
    %s47 = sld [smem:[#allocation4]]
    %v48 = vstv %s47
    %v49 = vadd.f32 %v46, %v48
    %s50 = sld [smem:[#allocation2 + $0x80]]
    %v51 = vstv %s50
    %v52 = vmul.f32 %v41, %v51
    %v53 = vadd.f32 %v49, %v52
    %s54 = sld [smem:[#allocation2 + $0x100]]
    %v55 = vstv %s54
    %v56 = vmul.f32 %v43, %v55
    %v57 = vadd.f32 %v53, %v56
    %58 = vst [vmem:[%s3] sm:$0x1] %v57
    %s59 = sld [smem:[#allocation2 + $0x1]]
    %v60 = vstv %s59
    %v61 = vmul.f32 %v39, %v60
    %s62 = sld [smem:[#allocation4 + $0x1]]
    %v63 = vstv %s62
    %v64 = vadd.f32 %v61, %v63
    %s65 = sld [smem:[#allocation2 + $0x81]]
    %v66 = vstv %s65
    %v67 = vmul.f32 %v41, %v66
    %v68 = vadd.f32 %v64, %v67
    %s69 = sld [smem:[#allocation2 + $0x101]]
    %v70 = vstv %s69
    %v71 = vmul.f32 %v43, %v70
    %v72 = vadd.f32 %v68, %v71
    %s73 = scalar_lea.vmem %s3, 1
    %74 = vst [vmem:[%s73] sm:$0x1] %v72
    // Predicated region
    $region22: #{perceptron_forward.1} parent=1 // pred_check
      _
    $region23: #{perceptron_forward.1} parent=1 // pred_check_branch
      %76 = sbr.rel (0) target = $region25
    $region24: #{perceptron_forward.1} parent=1 // pred_region
      _
    $region25: #{perceptron_forward.1} parent=1 // pred_fallthru
      _
    // Predicated region
    $region26: #{perceptron_forward.1} parent=1 // pred_check
      _
    $region27: #{perceptron_forward.1} parent=1 // pred_check_branch
      %78 = sbr.rel (0) target = $region29
    $region28: #{perceptron_forward.1} parent=1 // pred_region
      _
    $region29: #{perceptron_forward.1} parent=1 // pred_fallthru
      _
    %79 = vsyncpa [#allocation3], 1
    %80 = vsyncpa [#allocation5], 1

</llo_original>
